<compile_context>
chip_gen: v7x
topology: tpu7x:2x2x1
jax: 0.10.0
libtpu: 0.0.40
codegen_flags: <defaults>
</compile_context>

<pallas_src>
import functools

import jax
import jax.numpy as jnp
from jax.experimental import pallas as pl
from jax.experimental.pallas import tpu as pltpu


def _linear_kernel_single_k(x_ref, w_ref, b_ref, o_ref):
    """Whole K in one tile: no accumulator scratch, no init/finalize.

    x_ref: [tm, tk]  activation tile (compute dtype)
    w_ref: [tk, tn]  pre-transposed weight tile (compute dtype)
    b_ref: [1,  tn]  bias tile (f32)
    o_ref: [tm, tn]  output tile
    """
    o_ref[...] = (
        jnp.dot(x_ref[...], w_ref[...], preferred_element_type=jnp.float32)
        + b_ref[...]
    ).astype(o_ref.dtype)


def _linear_kernel_multi_k(x_ref, w_ref, b_ref, o_ref, acc_ref):
    """K-tiled reduction. Only used when num_programs(2) >= 2.

    Final k step writes acc + p + bias directly (no extra acc store/load).
    """
    k = pl.program_id(2)
    last = pl.num_programs(2) - 1

    p = jnp.dot(x_ref[...], w_ref[...], preferred_element_type=jnp.float32)

    @pl.when(k == 0)
    def _init():
        acc_ref[...] = p

    @pl.when(jnp.logical_and(k > 0, k < last))
    def _accumulate():
        acc_ref[...] += p

    @pl.when(k == last)
    def _finalize():
        # Bias added exactly once, after the K reduction completes.
        o_ref[...] = (acc_ref[...] + p + b_ref[...]).astype(o_ref.dtype)


def _round_up(a: int, m: int) -> int:
    return (a + m - 1) // m * m


@functools.partial(jax.jit, static_argnames=("tm", "tn", "tk", "compute_dtype"))
def single_layer_nn(x, weight, bias, *, tm: int = 256, tn: int = 512,
                    tk: int = 1024, compute_dtype=jnp.bfloat16):
    """Forward pass of SingleLayerNeuralNet (a single nn.Linear).

    x:      [B, input_dim]            float32
    weight: [output_dim, input_dim]   (PyTorch nn.Linear convention)
    bias:   [output_dim]
    returns [B, output_dim]           x.dtype

    compute_dtype=jnp.bfloat16 runs the MXU at its native rate with f32
    accumulation (slight numerics change vs f32); pass jnp.float32 for
    bit-faithful nn.Linear numerics.
    """
    B, in_dim = x.shape
    out_dim, in_dim_w = weight.shape
    assert in_dim_w == in_dim

    out_dtype = x.dtype
    cdt = jnp.dtype(compute_dtype)
    sublane = 16 if cdt == jnp.dtype(jnp.bfloat16) else 8

    # Clamp tiles for small problems, keeping hardware-friendly alignment:
    # sublane multiples (8 f32 / 16 bf16), lane multiples of 128.
    tm = min(tm, _round_up(B, sublane))
    tn = min(tn, _round_up(out_dim, 128))
    tk = min(tk, _round_up(in_dim, 128))

    Mp = _round_up(B, tm)
    Kp = _round_up(in_dim, tk)
    Np = _round_up(out_dim, tn)

    # One fused XLA pass per operand: cast (-> transpose for W) -> zero-pad.
    # Zero K padding contributes nothing to the dot; padding is sliced off.
    x_p = jnp.pad(x.astype(cdt), ((0, Mp - B), (0, Kp - in_dim)))
    w_p = jnp.pad(weight.T.astype(cdt), ((0, Kp - in_dim), (0, Np - out_dim)))
    b_p = jnp.pad(bias.astype(jnp.float32), (0, Np - out_dim)).reshape(1, Np)

    gm, gn, gk = Mp // tm, Np // tn, Kp // tk

    in_bytes = cdt.itemsize
    out_bytes = jnp.dtype(out_dtype).itemsize
    cost = pl.CostEstimate(
        flops=2 * Mp * Np * Kp,
        transcendentals=0,
        bytes_accessed=(in_bytes * Mp * Kp * gn      # x re-read per N tile
                        + in_bytes * Kp * Np * gm    # W re-read per M tile
                        + out_bytes * Mp * Np        # output written once
                        + 4 * Np * gm),              # bias re-read per M tile
    )

    if gk == 1:
        # Common single-Linear case: whole K fits one tile -> no accumulator.
        kernel = _linear_kernel_single_k
        grid_spec = pltpu.PrefetchScalarGridSpec(
            num_scalar_prefetch=0,
            grid=(gm, gn),
            in_specs=[
                pl.BlockSpec((tm, tk), lambda i, j: (i, 0)),   # x tile
                pl.BlockSpec((tk, tn), lambda i, j: (0, j)),   # W^T tile
                pl.BlockSpec((1, tn), lambda i, j: (0, j)),    # bias tile
            ],
            out_specs=pl.BlockSpec((tm, tn), lambda i, j: (i, j)),
        )
        dims = ("parallel", "parallel")
    else:
        kernel = _linear_kernel_multi_k
        grid_spec = pltpu.PrefetchScalarGridSpec(
            num_scalar_prefetch=0,
            grid=(gm, gn, gk),
            in_specs=[
                pl.BlockSpec((tm, tk), lambda i, j, k: (i, k)),   # x tile
                pl.BlockSpec((tk, tn), lambda i, j, k: (k, j)),   # W^T tile
                pl.BlockSpec((1, tn), lambda i, j, k: (0, j)),    # bias tile
            ],
            out_specs=pl.BlockSpec((tm, tn), lambda i, j, k: (i, j)),
            scratch_shapes=[pltpu.VMEM((tm, tn), jnp.float32)],
        )
        dims = ("parallel", "parallel", "arbitrary")

    out_p = pl.pallas_call(
        kernel,
        out_shape=jax.ShapeDtypeStruct((Mp, Np), out_dtype),
        grid_spec=grid_spec,
        compiler_params=pltpu.CompilerParams(dimension_semantics=dims),
        cost_estimate=cost,
    )(x_p, w_p, b_p)

    # Slice padding back off (no-op when shapes were already aligned).
    return out_p[:B, :out_dim]


if __name__ == "__main__":
    # Small shapes consistent with a single Linear layer.
    # NOTE: at this size the call is launch-overhead-bound; plain XLA would be
    # faster. The kernel is written so the same code scales to real sizes.
    batch, input_dim, output_dim = 8, 32, 16

    key = jax.random.PRNGKey(0)
    kx, kw, kb = jax.random.split(key, 3)

    x = jax.random.normal(kx, (batch, input_dim), dtype=jnp.float32)
    # Deterministic "init" mimicking nn.Linear's uniform(-1/sqrt(in), 1/sqrt(in))
    bound = 1.0 / jnp.sqrt(jnp.float32(input_dim))
    weight = jax.random.uniform(kw, (output_dim, input_dim),
                                minval=-bound, maxval=bound, dtype=jnp.float32)
    bias = jax.random.uniform(kb, (output_dim,),
                              minval=-bound, maxval=bound, dtype=jnp.float32)

    ref = x @ weight.T + bias

    # 1) Default bf16 MXU path (f32 accumulation) — single-K fast kernel.
    out_bf16 = single_layer_nn(x, weight, bias)
    jax.block_until_ready(out_bf16)
    assert out_bf16.shape == (batch, output_dim)
    assert out_bf16.dtype == x.dtype
    assert jnp.allclose(out_bf16, ref, atol=2e-2, rtol=2e-2)

    # 2) Bit-faithful f32 path — matches nn.Linear numerics tightly.
    out_f32 = single_layer_nn(x, weight, bias, compute_dtype=jnp.float32)
    jax.block_until_ready(out_f32)
    assert jnp.allclose(out_f32, ref, atol=1e-5, rtol=1e-5)

    # 3) Exercise the K-tiled accumulator kernel (force multiple K tiles).
    in_dim2, out_dim2 = 384, 256
    k2x, k2w, k2b = jax.random.split(jax.random.PRNGKey(1), 3)
    x2 = jax.random.normal(k2x, (batch, in_dim2), dtype=jnp.float32)
    b2d = 1.0 / jnp.sqrt(jnp.float32(in_dim2))
    w2 = jax.random.uniform(k2w, (out_dim2, in_dim2), minval=-b2d, maxval=b2d,
                            dtype=jnp.float32)
    b2 = jax.random.uniform(k2b, (out_dim2,), minval=-b2d, maxval=b2d,
                            dtype=jnp.float32)
    out2 = single_layer_nn(x2, w2, b2, tk=128, compute_dtype=jnp.float32)
    jax.block_until_ready(out2)
    assert jnp.allclose(out2, x2 @ w2.T + b2, atol=1e-5, rtol=1e-5)

    print("KERNEL_OK")
</pallas_src>

<mosaic_0001>
module attributes {stable_mosaic.version = 11 : i64} {
  func.func @_linear_kernel_single_k(%arg0: i32, %arg1: i32, %arg2: memref<16x128xbf16, #tpu.memory_space<vmem>>, %arg3: memref<128x128xbf16, #tpu.memory_space<vmem>>, %arg4: memref<1x128xf32, #tpu.memory_space<vmem>>, %arg5: memref<16x128xf32, #tpu.memory_space<vmem>>) attributes {dimension_semantics = [#tpu.dimension_semantics<parallel>, #tpu.dimension_semantics<parallel>], iteration_bounds = array<i64: 1, 1>, scalar_prefetch = 0 : i64, scratch_operands = 0 : i64, tpu.core_type = #tpu.core_type<tc>, window_params = [{transform_indices = @transform_0, window_bounds = array<i64: 16, 128>}, {transform_indices = @transform_1, window_bounds = array<i64: 128, 128>}, {transform_indices = @transform_2, window_bounds = array<i64: 1, 128>}, {transform_indices = @transform_3, window_bounds = array<i64: 16, 128>}]} {
    %c0 = arith.constant 0 : index
    %c0_0 = arith.constant 0 : index
    %0 = vector.load %arg2[%c0, %c0_0] : memref<16x128xbf16, #tpu.memory_space<vmem>>, vector<16x128xbf16>
    %c0_1 = arith.constant 0 : index
    %c0_2 = arith.constant 0 : index
    %1 = vector.load %arg3[%c0_1, %c0_2] : memref<128x128xbf16, #tpu.memory_space<vmem>>, vector<128x128xbf16>
    %cst = arith.constant dense<0.000000e+00> : vector<16x128xf32>
    %2 = tpu.matmul %0, %1, %cst {dimension_numbers = #tpu.dot_dimension_numbers<[1], [0], [0], [1], [0, 0, 1, 1], [], []>} : vector<16x128xbf16>, vector<128x128xbf16>, vector<16x128xf32> -> vector<16x128xf32>
    %c0_3 = arith.constant 0 : index
    %c0_4 = arith.constant 0 : index
    %3 = vector.load %arg4[%c0_3, %c0_4] : memref<1x128xf32, #tpu.memory_space<vmem>>, vector<1x128xf32>
    %4 = vector.broadcast %3 : vector<1x128xf32> to vector<16x128xf32>
    %5 = arith.addf %2, %4 : vector<16x128xf32>
    %c0_5 = arith.constant 0 : index
    %c0_6 = arith.constant 0 : index
    %6 = vector.load %arg5[%c0_5, %c0_6] : memref<16x128xf32, #tpu.memory_space<vmem>>, vector<16x128xf32>
    tpu.vector_store %arg5[%c0_5, %c0_6], %5 {strides = array<i32>} : memref<16x128xf32, #tpu.memory_space<vmem>>, vector<16x128xf32>,
    return
  }
  func.func @transform_0(%arg0: i32, %arg1: i32) -> (i32, i32) {
    %c0_i32 = arith.constant 0 : i32
    %c0_i32_0 = arith.constant 0 : i32
    return %arg0, %c0_i32 : i32, i32
  }
  func.func @transform_1(%arg0: i32, %arg1: i32) -> (i32, i32) {
    %c0_i32 = arith.constant 0 : i32
    %c0_i32_0 = arith.constant 0 : i32
    return %c0_i32, %arg1 : i32, i32
  }
  func.func @transform_2(%arg0: i32, %arg1: i32) -> (i32, i32) {
    %c0_i32 = arith.constant 0 : i32
    %c0_i32_0 = arith.constant 0 : i32
    return %c0_i32, %arg1 : i32, i32
  }
  func.func @transform_3(%arg0: i32, %arg1: i32) -> (i32, i32) {
    %c0_i32 = arith.constant 0 : i32
    return %arg0, %arg1 : i32, i32
  }
}

</mosaic_0001>

<llo_original>
// kernel: single_layer_nn.1
$region0: #{single_layer_nn.1}
  #allocation0 [shape = 'u32[]', space=smem, size = 0x4, offset = 0x4, fixed_abs, tag = 'smem constant byte address 0x4 - core index']
  #allocation1 [shape = 'u32[144,128]{1,0:T(1,128)}', space=vmem, size = 0x12000, scoped, tag = 'internal scratch']
  %s0 = inlined_call_operand.vmem [shape: bf16[16,128], index: 0, kind: input, shape index: {}]
  %s1 = inlined_call_operand.vmem [shape: bf16[128,128], index: 1, kind: input, shape index: {}]
  %s2 = inlined_call_operand.vmem [shape: f32[1,128], index: 2, kind: input, shape index: {}]
  %s3 = inlined_call_operand.vmem [shape: f32[16,128], index: 3, kind: output, shape index: {}]
  %s4 = sld [smem:[#allocation0]]
  $region22: #{single_layer_nn.1} parent=0
    _
  %s6 = ssub.s32 1, %s4
  %s7 = scalar_select 0, %s6, %s4
  // Predicated region
  $region2: #{single_layer_nn.1} parent=0 // pred_check
    _
  $region3: #{single_layer_nn.1} parent=0 // pred_check_branch
    %9 = sbr.rel (0) target = $region5
  $region4: #{single_layer_nn.1} parent=0 // pred_region
    _
  $region5: #{single_layer_nn.1} parent=0 // pred_fallthru
    _
  // Predicated region
  $region6: #{single_layer_nn.1} parent=0 // pred_check
    _
  $region7: #{single_layer_nn.1} parent=0 // pred_check_branch
    %11 = sbr.rel (0) target = $region9
  $region8: #{single_layer_nn.1} parent=0 // pred_region
    _
  $region9: #{single_layer_nn.1} parent=0 // pred_fallthru
    _
  // Predicated region
  $region10: #{single_layer_nn.1} parent=0 // pred_check
    _
  $region11: #{single_layer_nn.1} parent=0 // pred_check_branch
    %13 = sbr.rel (0) target = $region13
  $region12: #{single_layer_nn.1} parent=0 // pred_region
    _
  $region13: #{single_layer_nn.1} parent=0 // pred_fallthru
    _
  %v15 = vld [vmem:[%s0] sm:$0xf]
  %v16 = vld [vmem:[%s0 + $0x4] sm:$0xf]
  %v17 = vld [vmem:[%s1] sm:$0xf]
  %v18 = vld [vmem:[%s1 + $0x4] sm:$0xf]
  %v19 = vld [vmem:[%s1 + $0x8] sm:$0xf]
  %v20 = vld [vmem:[%s1 + $0xc] sm:$0xf]
  %v21 = vld [vmem:[%s1 + $0x10] sm:$0xf]
  %v22 = vld [vmem:[%s1 + $0x14] sm:$0xf]
  %v23 = vld [vmem:[%s1 + $0x18] sm:$0xf]
  %v24 = vld [vmem:[%s1 + $0x1c] sm:$0xf]
  %v25 = vld [vmem:[%s1 + $0x20] sm:$0xf]
  %v26 = vld [vmem:[%s1 + $0x24] sm:$0xf]
  %v27 = vld [vmem:[%s1 + $0x28] sm:$0xf]
  %v28 = vld [vmem:[%s1 + $0x2c] sm:$0xf]
  %v29 = vld [vmem:[%s1 + $0x30] sm:$0xf]
  %v30 = vld [vmem:[%s1 + $0x34] sm:$0xf]
  %v31 = vld [vmem:[%s1 + $0x38] sm:$0xf]
  %v32 = vld [vmem:[%s1 + $0x3c] sm:$0xf]
  %v33 = vld [vmem:[%s2] sm:$0x1]
  %v35 = vlaneseq
  %v36 = vshrl.u32 %v35, 7
  %v37 = vsub.s32 0, %v36
  %v38 = vrot.slane %v33, %v37
  %v42 = vunpack.c.l.b16 %v15
  %v43 = vunpack.c.l.b16 %v16
  %v44 = vpack.c.b16 %v43, %v42
  %v62 = vunpack.c.l.b16 %v17
  %v63 = vunpack.c.l.b16 %v18
  %v64 = vunpack.c.l.b16 %v19
  %v65 = vunpack.c.l.b16 %v20
  %v66 = vunpack.c.l.b16 %v21
  %v67 = vunpack.c.l.b16 %v22
  %v68 = vunpack.c.l.b16 %v23
  %v69 = vunpack.c.l.b16 %v24
  %v70 = vunpack.c.l.b16 %v25
  %v71 = vunpack.c.l.b16 %v26
  %v72 = vunpack.c.l.b16 %v27
  %v73 = vunpack.c.l.b16 %v28
  %v74 = vunpack.c.l.b16 %v29
  %v75 = vunpack.c.l.b16 %v30
  %v76 = vunpack.c.l.b16 %v31
  %v77 = vunpack.c.l.b16 %v32
  %v78 = vpack.c.b16 %v63, %v62
  %v79 = vpack.c.b16 %v65, %v64
  %v80 = vpack.c.b16 %v67, %v66
  %v81 = vpack.c.b16 %v69, %v68
  %v82 = vpack.c.b16 %v71, %v70
  %v83 = vpack.c.b16 %v73, %v72
  %v84 = vpack.c.b16 %v75, %v74
  %v85 = vpack.c.b16 %v77, %v76
  %94 = vmatprep.subr.bf16.mxu0 0
  %95 = vmatpush1.bf16.msra.mxu0 %v78
  %96 = vmatprep.subr.bf16.mxu0 0
  %97 = vmatpush1.bf16.msra.mxu0 %v79
  %98 = vmatprep.subr.bf16.mxu0 0
  %99 = vmatpush1.bf16.msra.mxu0 %v80
  %100 = vmatprep.subr.bf16.mxu0 0
  %101 = vmatpush1.bf16.msra.mxu0 %v81
  %102 = vmatprep.subr.bf16.mxu0 0
  %103 = vmatpush1.bf16.msra.mxu0 %v82
  %104 = vmatprep.subr.bf16.mxu0 0
  %105 = vmatpush1.bf16.msra.mxu0 %v83
  %106 = vmatprep.subr.bf16.mxu0 0
  %107 = vmatpush1.bf16.msra.mxu0 %v84
  %108 = vmatprep.subr.bf16.mxu0 0
  %109 = vmatpush1.bf16.msra.mxu0 %v85
  %110 = vmatprep.subr.bf16.mxu0 0
  %111 = vmatpush1.bf16.msra.mxu0 0
  %112 = vmatprep.subr.bf16.mxu0 0
  %113 = vmatpush1.bf16.msra.mxu0 0
  %114 = vmatprep.subr.bf16.mxu0 0
  %115 = vmatpush1.bf16.msra.mxu0 0
  %116 = vmatprep.subr.bf16.mxu0 0
  %117 = vmatpush1.bf16.msra.mxu0 0
  %118 = vmatprep.subr.bf16.mxu0 0
  %119 = vmatpush1.bf16.msra.mxu0 0
  %120 = vmatprep.subr.bf16.mxu0 0
  %121 = vmatpush1.bf16.msra.mxu0 0
  %122 = vmatprep.subr.bf16.mxu0 0
  %123 = vmatpush1.bf16.msra.mxu0 0
  %124 = vmatprep.subr.bf16.mxu0 0
  %125 = vmatpush1.bf16.msra.mxu0 0
  %126 = vmatprep.mubr.bf16.mxu0 0
  %127 = vmatmul.mubr.bf16.gmra.mrb[0].mxu0 %v44
  %v128 = vpop.f32.mrb[0].mxu0
  %v129 = vadd.f32 %v38, %v128
  %v130 = vpop.f32.mrb[0].mxu0
  %v131 = vpop.f32.mrb[0].mxu0
  %v132 = vadd.f32 %v38, %v131
  %v133 = vpop.f32.mrb[0].mxu0
  %134 = vdwg.mxu0
  %135 = vst [vmem:[%s3] sm:$0xff] %v129
  %136 = vst [vmem:[%s3 + $0x8] sm:$0xff] %v132
  // Predicated region
  $region14: #{single_layer_nn.1} parent=0 // pred_check
    _
  $region15: #{single_layer_nn.1} parent=0 // pred_check_branch
    %138 = sbr.rel (0) target = $region17
  $region16: #{single_layer_nn.1} parent=0 // pred_region
    _
  $region17: #{single_layer_nn.1} parent=0 // pred_fallthru
    _
  // Predicated region
  $region18: #{single_layer_nn.1} parent=0 // pred_check
    _
  $region19: #{single_layer_nn.1} parent=0 // pred_check_branch
    %140 = sbr.rel (0) target = $region21
  $region20: #{single_layer_nn.1} parent=0 // pred_region
    _
  $region21: #{single_layer_nn.1} parent=0 // pred_fallthru
    _

</llo_original>
